<compile_context>
chip_gen: v5e
topology: v5e:2x2
jax: 0.10.0
libtpu: 0.0.40
codegen_flags: <defaults>
</compile_context>

<pallas_src>
import jax
import jax.numpy as jnp
from jax.experimental import pallas as pl
from jax.experimental.pallas import tpu as pltpu

_LANE = 128
_ROW_ALIGN = 16          # sublane packing for bf16 tiles (also valid for f32)
_TM_MAX = 1024           # default max rows per grid step
_MIN_SPLIT_ROWS = 256    # above this, force >=2 grid steps (v7x megacore)


def _round_up(n, m):
    return ((n + m - 1) // m) * m


def _choose_row_tile(m, tm_max):
    """Pick (tm, grid_m): large tiles, no near-2x padding blowup when M = tm + eps,
    and >=2 grid steps once M is big enough for v7x's second TensorCore to help."""
    m_ceil = _round_up(m, _ROW_ALIGN)
    n_tiles = pl.cdiv(m_ceil, tm_max)
    if n_tiles < 2 and m_ceil >= _MIN_SPLIT_ROWS:
        n_tiles = 2
    tm = _round_up(pl.cdiv(m_ceil, n_tiles), _ROW_ALIGN)
    return tm, pl.cdiv(m, tm)


def _mlp_kernel(x_ref, w1_ref, b1_ref, w2_ref, b2_ref, o_ref):
    # Cast activations to the compute dtype in VMEM (x crosses HBM once, as f32).
    x = x_ref[...].astype(w1_ref.dtype)
    h = jnp.dot(x, w1_ref[...], preferred_element_type=jnp.float32) + b1_ref[...]
    h = jnp.maximum(h, 0.0)                                     # ReLU, f32 on VPU
    o = jnp.dot(h.astype(w2_ref.dtype), w2_ref[...],
                preferred_element_type=jnp.float32) + b2_ref[...]
    o_ref[...] = o.astype(o_ref.dtype)


def prepare_room_prediction_params(w1, b1, w2, b2, *, compute_dtype=jnp.bfloat16):
    """One-time (init-time) weight prep: cast + lane-pad the hidden dim to 128.

    Padding is numerically inert: padded hidden columns stay 0 through bias+ReLU
    and the matching padded rows of w2 are 0, so they contribute nothing.
    Call this once per set of weights; do NOT call it per forward.
    """
    f_in, hidden = w1.shape
    out_size = w2.shape[1]
    h_pad = _round_up(hidden, _LANE)
    w1p = jnp.zeros((f_in, h_pad), compute_dtype).at[:, :hidden].set(
        w1.astype(compute_dtype))
    b1p = jnp.zeros((1, h_pad), jnp.float32).at[0, :hidden].set(
        b1.astype(jnp.float32))
    w2p = jnp.zeros((h_pad, out_size), compute_dtype).at[:hidden, :].set(
        w2.astype(compute_dtype))
    b2p = b2.astype(jnp.float32).reshape(1, out_size)
    return w1p, b1p, w2p, b2p


def room_prediction_forward(x, params, *, tm_max=_TM_MAX):
    """x: [..., input_size] -> [..., output_size] (f32). `params` from prepare_*()."""
    w1p, b1p, w2p, b2p = params
    f_in, h_pad = w1p.shape
    out_size = w2p.shape[1]

    lead = x.shape[:-1]
    x2 = x.reshape(-1, f_in)
    M = x2.shape[0]
    tm, grid_m = _choose_row_tile(M, tm_max)

    w_itemsize = jnp.dtype(w1p.dtype).itemsize
    cost = pl.CostEstimate(
        flops=2 * M * (f_in * h_pad + h_pad * out_size),
        transcendentals=0,
        bytes_accessed=(x2.size * x2.dtype.itemsize
                        + (w1p.size + w2p.size) * w_itemsize
                        + (b1p.size + b2p.size) * 4
                        + M * out_size * 4),
    )

    out = pl.pallas_call(
        _mlp_kernel,
        out_shape=jax.ShapeDtypeStruct((M, out_size), jnp.float32),
        grid=(grid_m,),
        in_specs=[
            pl.BlockSpec((tm, f_in), lambda i: (i, 0)),          # x tile (pipelined)
            pl.BlockSpec((f_in, h_pad), lambda i: (0, 0)),       # w1 (resident)
            pl.BlockSpec((1, h_pad), lambda i: (0, 0)),          # b1 (resident)
            pl.BlockSpec((h_pad, out_size), lambda i: (0, 0)),   # w2 (resident)
            pl.BlockSpec((1, out_size), lambda i: (0, 0)),       # b2 (resident)
        ],
        out_specs=pl.BlockSpec((tm, out_size), lambda i: (i, 0)),
        compiler_params=pltpu.CompilerParams(
            dimension_semantics=("parallel",)),
        cost_estimate=cost,
    )(x2, w1p, b1p, w2p, b2p)

    return out.reshape(*lead, out_size)


if __name__ == "__main__":
    # Small shapes consistent with the module: a batch of token features.
    batch, seq = 2, 8
    input_size = 32
    hidden_size = 32        # module default: hidden_size = input_size
    output_size = 16

    key = jax.random.PRNGKey(0)
    kx, k1, kb1, k2, kb2 = jax.random.split(key, 5)

    x = jax.random.normal(kx, (batch, seq, input_size), dtype=jnp.float32)

    # Deterministic PyTorch-style uniform init; weights stored [in, out].
    bound1 = 1.0 / (input_size ** 0.5)
    w1 = jax.random.uniform(k1, (input_size, hidden_size), minval=-bound1,
                            maxval=bound1, dtype=jnp.float32)
    b1 = jax.random.uniform(kb1, (hidden_size,), minval=-bound1, maxval=bound1,
                            dtype=jnp.float32)
    bound2 = 1.0 / (hidden_size ** 0.5)
    w2 = jax.random.uniform(k2, (hidden_size, output_size), minval=-bound2,
                            maxval=bound2, dtype=jnp.float32)
    b2 = jax.random.uniform(kb2, (output_size,), minval=-bound2, maxval=bound2,
                            dtype=jnp.float32)

    ref_f32 = jnp.maximum(x @ w1 + b1, 0.0) @ w2 + b2

    # Default (bf16 operands, f32 accumulation) path.
    params_bf16 = prepare_room_prediction_params(w1, b1, w2, b2)   # once, at "init"
    out = jax.block_until_ready(room_prediction_forward(x, params_bf16))
    assert out.shape == (batch, seq, output_size)
    assert out.dtype == jnp.float32

    # Tight check against a reference on the same bf16-operand / f32-accumulate path.
    xb, w1b, w2b = (t.astype(jnp.bfloat16) for t in (x, w1, w2))
    h_ref = jnp.maximum(jnp.dot(xb, w1b, preferred_element_type=jnp.float32) + b1, 0.0)
    ref_bf16 = jnp.dot(h_ref.astype(jnp.bfloat16), w2b,
                       preferred_element_type=jnp.float32) + b2
    assert jnp.allclose(out, ref_bf16, atol=5e-3, rtol=5e-3)
    # Loose check against the full-f32 module semantics (bf16 round-off).
    assert jnp.allclose(out, ref_f32, atol=5e-2, rtol=5e-2)

    # f32-compute option for strict-parity users.
    params_f32 = prepare_room_prediction_params(w1, b1, w2, b2,
                                                compute_dtype=jnp.float32)
    out_f32 = jax.block_until_ready(room_prediction_forward(x, params_f32))
    assert jnp.allclose(out_f32, ref_f32, atol=2e-2, rtol=2e-2)

    print("KERNEL_OK")
</pallas_src>

<mosaic_0001>
module attributes {stable_mosaic.version = 11 : i64} {
  func.func @_mlp_kernel(%arg0: i32, %arg1: memref<16x32xf32, #tpu.memory_space<vmem>>, %arg2: memref<32x128xbf16, #tpu.memory_space<vmem>>, %arg3: memref<1x128xf32, #tpu.memory_space<vmem>>, %arg4: memref<128x16xbf16, #tpu.memory_space<vmem>>, %arg5: memref<1x16xf32, #tpu.memory_space<vmem>>, %arg6: memref<16x16xf32, #tpu.memory_space<vmem>>) attributes {dimension_semantics = [#tpu.dimension_semantics<parallel>], iteration_bounds = array<i64: 1>, scalar_prefetch = 0 : i64, scratch_operands = 0 : i64, tpu.core_type = #tpu.core_type<tc>, window_params = [{transform_indices = @transform_0, window_bounds = array<i64: 16, 32>}, {pipeline_mode = #tpu.pipeline_mode<synchronous>, transform_indices = @transform_1, window_bounds = array<i64: 32, 128>}, {pipeline_mode = #tpu.pipeline_mode<synchronous>, transform_indices = @transform_2, window_bounds = array<i64: 1, 128>}, {pipeline_mode = #tpu.pipeline_mode<synchronous>, transform_indices = @transform_3, window_bounds = array<i64: 128, 16>}, {pipeline_mode = #tpu.pipeline_mode<synchronous>, transform_indices = @transform_4, window_bounds = array<i64: 1, 16>}, {transform_indices = @transform_5, window_bounds = array<i64: 16, 16>}]} {
    %c0 = arith.constant 0 : index
    %c0_0 = arith.constant 0 : index
    %0 = vector.load %arg1[%c0, %c0_0] : memref<16x32xf32, #tpu.memory_space<vmem>>, vector<16x32xf32>
    %1 = arith.truncf %0 : vector<16x32xf32> to vector<16x32xbf16>
    %c0_1 = arith.constant 0 : index
    %c0_2 = arith.constant 0 : index
    %2 = vector.load %arg2[%c0_1, %c0_2] : memref<32x128xbf16, #tpu.memory_space<vmem>>, vector<32x128xbf16>
    %cst = arith.constant dense<0.000000e+00> : vector<16x128xf32>
    %3 = tpu.matmul %1, %2, %cst {dimension_numbers = #tpu.dot_dimension_numbers<[1], [0], [0], [1], [0, 0, 1, 1], [], []>} : vector<16x32xbf16>, vector<32x128xbf16>, vector<16x128xf32> -> vector<16x128xf32>
    %c0_3 = arith.constant 0 : index
    %c0_4 = arith.constant 0 : index
    %4 = vector.load %arg3[%c0_3, %c0_4] : memref<1x128xf32, #tpu.memory_space<vmem>>, vector<1x128xf32>
    %5 = vector.broadcast %4 : vector<1x128xf32> to vector<16x128xf32>
    %6 = arith.addf %3, %5 : vector<16x128xf32>
    %cst_5 = arith.constant 0.000000e+00 : f32
    %7 = vector.broadcast %cst_5 : f32 to vector<16x128xf32>
    %8 = arith.maximumf %6, %7 : vector<16x128xf32>
    %9 = arith.truncf %8 : vector<16x128xf32> to vector<16x128xbf16>
    %c0_6 = arith.constant 0 : index
    %c0_7 = arith.constant 0 : index
    %10 = vector.load %arg4[%c0_6, %c0_7] : memref<128x16xbf16, #tpu.memory_space<vmem>>, vector<128x16xbf16>
    %cst_8 = arith.constant dense<0.000000e+00> : vector<16x16xf32>
    %11 = tpu.matmul %9, %10, %cst_8 {dimension_numbers = #tpu.dot_dimension_numbers<[1], [0], [0], [1], [0, 0, 1, 1], [], []>} : vector<16x128xbf16>, vector<128x16xbf16>, vector<16x16xf32> -> vector<16x16xf32>
    %c0_9 = arith.constant 0 : index
    %c0_10 = arith.constant 0 : index
    %12 = vector.load %arg5[%c0_9, %c0_10] : memref<1x16xf32, #tpu.memory_space<vmem>>, vector<1x16xf32>
    %13 = vector.broadcast %12 : vector<1x16xf32> to vector<16x16xf32>
    %14 = arith.addf %11, %13 : vector<16x16xf32>
    %c0_11 = arith.constant 0 : index
    %c0_12 = arith.constant 0 : index
    %15 = vector.load %arg6[%c0_11, %c0_12] : memref<16x16xf32, #tpu.memory_space<vmem>>, vector<16x16xf32>
    tpu.vector_store %arg6[%c0_11, %c0_12], %14 {strides = array<i32>} : memref<16x16xf32, #tpu.memory_space<vmem>>, vector<16x16xf32>,
    return
  }
  func.func @transform_0(%arg0: i32) -> (i32, i32) {
    %c0_i32 = arith.constant 0 : i32
    %c0_i32_0 = arith.constant 0 : i32
    return %arg0, %c0_i32 : i32, i32
  }
  func.func @transform_1(%arg0: i32) -> (i32, i32) {
    %c0_i32 = arith.constant 0 : i32
    %c0_i32_0 = arith.constant 0 : i32
    %c0_i32_1 = arith.constant 0 : i32
    return %c0_i32, %c0_i32_0 : i32, i32
  }
  func.func @transform_2(%arg0: i32) -> (i32, i32) {
    %c0_i32 = arith.constant 0 : i32
    %c0_i32_0 = arith.constant 0 : i32
    %c0_i32_1 = arith.constant 0 : i32
    return %c0_i32, %c0_i32_0 : i32, i32
  }
  func.func @transform_3(%arg0: i32) -> (i32, i32) {
    %c0_i32 = arith.constant 0 : i32
    %c0_i32_0 = arith.constant 0 : i32
    %c0_i32_1 = arith.constant 0 : i32
    return %c0_i32, %c0_i32_0 : i32, i32
  }
  func.func @transform_4(%arg0: i32) -> (i32, i32) {
    %c0_i32 = arith.constant 0 : i32
    %c0_i32_0 = arith.constant 0 : i32
    %c0_i32_1 = arith.constant 0 : i32
    return %c0_i32, %c0_i32_0 : i32, i32
  }
  func.func @transform_5(%arg0: i32) -> (i32, i32) {
    %c0_i32 = arith.constant 0 : i32
    %c0_i32_0 = arith.constant 0 : i32
    return %arg0, %c0_i32 : i32, i32
  }
}

</mosaic_0001>

<llo_original>
// kernel: tpu_custom_call.1
$region0: #{tpu_custom_call.1}
  #allocation0 [shape = 'u32[]', space=smem, size = 0x4, offset = 0x4, fixed_abs, tag = 'smem constant byte address 0x4 - core index']
  #allocation1 [shape = 'u32[72,128]{1,0:T(1,128)}', space=vmem, size = 0x9000, scoped, tag = 'internal scratch']
  %s0 = inlined_call_operand.vmem [shape: f32[16,32], index: 0, kind: input, shape index: {}]
  %s1 = inlined_call_operand.vmem [shape: bf16[32,128], index: 1, kind: input, shape index: {}]
  %s2 = inlined_call_operand.vmem [shape: f32[1,128], index: 2, kind: input, shape index: {}]
  %s3 = inlined_call_operand.vmem [shape: bf16[128,16], index: 3, kind: input, shape index: {}]
  %s4 = inlined_call_operand.vmem [shape: f32[1,16], index: 4, kind: input, shape index: {}]
  %s5 = inlined_call_operand.hbm [shape: f32[16,16], index: 5, kind: output, shape index: {}]
  %s6 = sld [smem:[#allocation0]]
  $region30: #{tpu_custom_call.1} parent=0
    _
  %s8 = ssub.s32 1, %s6
  %s9 = scalar_select 0, %s8, %s6
  $region1: #{tpu_custom_call.1} parent=0
    #allocation2 [shape = 'u8[8192]{0}', space=vmem, size = 0x2000, scoped, tag = 'output window, operand 0, single buffered']
    #allocation3 [shape = 's32[1]{0}', space=sflag, size = 0x4, scoped, tag = 'scoped memory for tpu_custom_call.1']
    %10 = vsyncpa [#allocation3], 0
    // Predicated region
    $region2: #{tpu_custom_call.1} parent=1 // pred_check
      _
    $region3: #{tpu_custom_call.1} parent=1 // pred_check_branch
      %12 = sbr.rel (0) target = $region5
    $region4: #{tpu_custom_call.1} parent=1 // pred_region
      _
    $region5: #{tpu_custom_call.1} parent=1 // pred_fallthru
      _
    // Predicated region
    $region6: #{tpu_custom_call.1} parent=1 // pred_check
      _
    $region7: #{tpu_custom_call.1} parent=1 // pred_check_branch
      %14 = sbr.rel (0) target = $region9
    $region8: #{tpu_custom_call.1} parent=1 // pred_region
      _
    $region9: #{tpu_custom_call.1} parent=1 // pred_fallthru
      _
    // Predicated region
    $region10: #{tpu_custom_call.1} parent=1 // pred_check
      _
    $region11: #{tpu_custom_call.1} parent=1 // pred_check_branch
      %16 = sbr.rel (0) target = $region13
    $region12: #{tpu_custom_call.1} parent=1 // pred_region
      _
    $region13: #{tpu_custom_call.1} parent=1 // pred_fallthru
      _
    // Predicated region
    $region14: #{tpu_custom_call.1} parent=1 // pred_check
      _
    $region15: #{tpu_custom_call.1} parent=1 // pred_check_branch
      %18 = sbr.rel (0) target = $region17
    $region16: #{tpu_custom_call.1} parent=1 // pred_region
      _
    $region17: #{tpu_custom_call.1} parent=1 // pred_fallthru
      _
    // Predicated region
    $region18: #{tpu_custom_call.1} parent=1 // pred_check
      _
    $region19: #{tpu_custom_call.1} parent=1 // pred_check_branch
      %20 = sbr.rel (0) target = $region21
    $region20: #{tpu_custom_call.1} parent=1 // pred_region
      _
    $region21: #{tpu_custom_call.1} parent=1 // pred_fallthru
      _
    %v22 = vld [vmem:[%s0] sm:$0xff]
    %v23 = vld [vmem:[%s0 + $0x8] sm:$0xff]
    %v24 = vpack.c.bf16 %v23, %v22
    %v25 = vld [vmem:[%s1] sm:$0xf]
    %v26 = vld [vmem:[%s1 + $0x4] sm:$0xf]
    %v27 = vld [vmem:[%s1 + $0x8] sm:$0xf]
    %v28 = vld [vmem:[%s1 + $0xc] sm:$0xf]
    %v29 = vld [vmem:[%s2] sm:$0x1]
    %v31 = vperm.slane %v29, 0
    %v37 = vunpack.c.l.b16 %v25
    %v38 = vunpack.c.l.b16 %v26
    %v39 = vunpack.c.l.b16 %v27
    %v40 = vunpack.c.l.b16 %v28
    %v41 = vpack.c.b16 %v38, %v37
    %v42 = vpack.c.b16 %v40, %v39
    %vm45 = vcmask 261120
    %v47 = vsel %vm45, %v24, 0
    %49 = vmatpush.bf16.msra.mxu0 0
    %50 = vmatpush.bf16.msra.mxu0 0
    %51 = vmatpush.bf16.msra.mxu0 0
    %52 = vmatpush.bf16.msra.mxu0 0
    %53 = vmatpush.bf16.msra.mxu0 0
    %54 = vmatpush.bf16.msra.mxu0 0
    %55 = vmatpush.bf16.msra.mxu0 %v42
    %56 = vmatpush.bf16.msra.mxu0 %v41
    %57 = vmatmul.bf16.gmra.mxu0 %v47
    %v58 = vpop.f32.mrf.mxu0
    %v59 = vadd.f32 %v31, %v58
    %v60 = vpop.f32.mrf.mxu0
    %v61 = vadd.f32 %v31, %v60
    %62 = vdwg.mxu0
    %v63 = vmax.f32 %v59, 0.0
    %v64 = vmax.f32 %v61, 0.0
    %v65 = vpack.c.bf16 %v64, %v63
    %v66 = vld [vmem:[%s3] sm:$0xf]
    %v67 = vld [vmem:[%s3 + $0x4] sm:$0xf]
    %v68 = vld [vmem:[%s3 + $0x8] sm:$0xf]
    %v69 = vld [vmem:[%s3 + $0xc] sm:$0xf]
    %v70 = vld [vmem:[%s3 + $0x10] sm:$0xf]
    %v71 = vld [vmem:[%s3 + $0x14] sm:$0xf]
    %v72 = vld [vmem:[%s3 + $0x18] sm:$0xf]
    %v73 = vld [vmem:[%s3 + $0x1c] sm:$0xf]
    %v74 = vld [vmem:[%s3 + $0x20] sm:$0xf]
    %v75 = vld [vmem:[%s3 + $0x24] sm:$0xf]
    %v76 = vld [vmem:[%s3 + $0x28] sm:$0xf]
    %v77 = vld [vmem:[%s3 + $0x2c] sm:$0xf]
    %v78 = vld [vmem:[%s3 + $0x30] sm:$0xf]
    %v79 = vld [vmem:[%s3 + $0x34] sm:$0xf]
    %v80 = vld [vmem:[%s3 + $0x38] sm:$0xf]
    %v81 = vld [vmem:[%s3 + $0x3c] sm:$0xf]
    %v82 = vld [vmem:[%s4] sm:$0x1]
    %v84 = vperm.slane %v82, 0
    %v102 = vunpack.c.l.b16 %v66
    %v103 = vunpack.c.l.b16 %v67
    %v104 = vunpack.c.l.b16 %v68
    %v105 = vunpack.c.l.b16 %v69
    %v106 = vunpack.c.l.b16 %v70
    %v107 = vunpack.c.l.b16 %v71
    %v108 = vunpack.c.l.b16 %v72
    %v109 = vunpack.c.l.b16 %v73
    %v110 = vunpack.c.l.b16 %v74
    %v111 = vunpack.c.l.b16 %v75
    %v112 = vunpack.c.l.b16 %v76
    %v113 = vunpack.c.l.b16 %v77
    %v114 = vunpack.c.l.b16 %v78
    %v115 = vunpack.c.l.b16 %v79
    %v116 = vunpack.c.l.b16 %v80
    %v117 = vunpack.c.l.b16 %v81
    %v118 = vpack.c.b16 %v103, %v102
    %v119 = vpack.c.b16 %v105, %v104
    %v120 = vpack.c.b16 %v107, %v106
    %v121 = vpack.c.b16 %v109, %v108
    %v122 = vpack.c.b16 %v111, %v110
    %v123 = vpack.c.b16 %v113, %v112
    %v124 = vpack.c.b16 %v115, %v114
    %v125 = vpack.c.b16 %v117, %v116
    %134 = vmatpush.bf16.msra.mxu0 %v125
    %135 = vmatpush.bf16.msra.mxu0 %v124
    %136 = vmatpush.bf16.msra.mxu0 %v123
    %137 = vmatpush.bf16.msra.mxu0 %v122
    %138 = vmatpush.bf16.msra.mxu0 %v121
    %139 = vmatpush.bf16.msra.mxu0 %v120
    %140 = vmatpush.bf16.msra.mxu0 %v119
    %141 = vmatpush.bf16.msra.mxu0 %v118
    %142 = vmatmul.bf16.gmra.mxu0 %v65
    %v143 = vpop.f32.mrf.mxu0
    %v144 = vadd.f32 %v84, %v143
    %v145 = vpop.f32.mrf.mxu0
    %v146 = vadd.f32 %v84, %v145
    %147 = vdwg.mxu0
    %vm148 = vcmask 130048
    %149 = vst.msk [vmem:[#allocation2] sm:$0xff] %vm148, %v144
    %150 = vst.msk [vmem:[#allocation2 + $0x8] sm:$0xff] %vm148, %v146
    // Predicated region
    $region22: #{tpu_custom_call.1} parent=1 // pred_check
      _
    $region23: #{tpu_custom_call.1} parent=1 // pred_check_branch
      %152 = sbr.rel (0) target = $region25
    $region24: #{tpu_custom_call.1} parent=1 // pred_region
      %154 = vsyncadd [#allocation3], 0
      %s155 = sshll.u32 [#allocation2], 4
      %s156 = int_to_ptr.vmem [resolvable:$true] %s155
      %s157 = sshll.u32 %s5, 4
      %s158 = int_to_ptr.hbm [resolvable:$true] %s157
      %163 = dma.vmem_to_hbm [thread:$0]  %s156, 256, %s158, [#allocation3], 128, 128, 8
    $region25: #{tpu_custom_call.1} parent=1 // pred_fallthru
      _
    // Predicated region
    $region26: #{tpu_custom_call.1} parent=1 // pred_check
      _
    $region27: #{tpu_custom_call.1} parent=1 // pred_check_branch
      %165 = sbr.rel (0) target = $region29
    $region28: #{tpu_custom_call.1} parent=1 // pred_region
      %167 = dma.done [#allocation3], 256
    $region29: #{tpu_custom_call.1} parent=1 // pred_fallthru
      _
    %168 = vsyncpa [#allocation3], 1

</llo_original>
